<compile_context>
chip_gen: v7x
topology: tpu7x:2x2x1
jax: 0.10.0
libtpu: 0.0.40
codegen_flags: <defaults>
</compile_context>

<pallas_src>
import jax
import jax.numpy as jnp
from jax.experimental import pallas as pl
from jax.experimental.pallas import tpu as pltpu


# ----------------------------------------------------------------------------
# Kernel: fused 4-layer MLP on one batch tile.
# ----------------------------------------------------------------------------
def _autoencoder_kernel(x_ref,
                        w1_ref, b1_ref,
                        w2_ref, b2_ref,
                        w3_ref, b3_ref,
                        w4_ref, b4_ref,
                        out_ref):
    x = x_ref[...].astype(jnp.float32)

    # encoder: Linear(input_dim, 2e) + ReLU
    h = jnp.dot(x, w1_ref[...], preferred_element_type=jnp.float32) + b1_ref[...]
    h = jnp.maximum(h, 0.0)

    # encoder: Linear(2e, e) + ReLU
    h = jnp.dot(h, w2_ref[...], preferred_element_type=jnp.float32) + b2_ref[...]
    h = jnp.maximum(h, 0.0)

    # decoder: Linear(e, 2e) + ReLU
    h = jnp.dot(h, w3_ref[...], preferred_element_type=jnp.float32) + b3_ref[...]
    h = jnp.maximum(h, 0.0)

    # decoder: Linear(2e, input_dim) + Sigmoid
    y = jnp.dot(h, w4_ref[...], preferred_element_type=jnp.float32) + b4_ref[...]
    out_ref[...] = jax.nn.sigmoid(y).astype(out_ref.dtype)


# ----------------------------------------------------------------------------
# Generation-aware VMEM / core configuration.
# ----------------------------------------------------------------------------
def _round_up(a, m):
    return -(-a // m) * m


def _tpu_config():
    """Per-chip VMEM limit and TensorCore count (conservative fallback)."""
    kind = ""
    try:
        kind = jax.devices()[0].device_kind.lower()
    except Exception:  # pragma: no cover - CPU / unknown backend
        pass
    if "v7" in kind:
        # 64 MiB physical per TC, 2 TCs per chip: leave headroom.
        return {"vmem_limit": 48 * 1024 * 1024, "num_tc": 2}
    if "v6" in kind or "v5" in kind:
        # 128 MiB physical, single TC; scoped default is only 16/32 MiB, so
        # raise it explicitly to unlock multi-MiB tiles.
        return {"vmem_limit": 96 * 1024 * 1024, "num_tc": 1}
    # Unknown chip: assume the tighter (v7x-like) budget.
    return {"vmem_limit": 48 * 1024 * 1024, "num_tc": 1}


def _choose_tiling(rows, lane, itemsize, weights_bytes, cfg):
    """Pick (block_rows, grid, rows_padded) for a cdiv/padded 1-D batch grid."""
    row_bytes = lane * itemsize

    # VMEM used by the pipeline: 2 buffers x (input tile + output tile),
    # plus the (double-buffered) grid-invariant weights, plus slack.
    tile_budget = max(cfg["vmem_limit"] - 2 * weights_bytes - (4 << 20), 2 << 20)
    max_rows_vmem = max(8, (tile_budget // (4 * row_bytes)) // 8 * 8)

    # Sweet spot: ~2 MiB per input tile (1-4 MiB region), <= 8192 rows.
    target_rows = max(8, min(8192, (2 << 20) // row_bytes) // 8 * 8)
    cap = min(max_rows_vmem, target_rows)

    rows8 = _round_up(rows, 8)

    if rows8 <= cap:
        # Whole batch fits in one VMEM-resident tile.
        min_split_rows = max(8, ((1 << 20) // row_bytes) // 8 * 8)  # ~1 MiB / TC
        if cfg["num_tc"] >= 2 and rows8 >= 2 * min_split_rows:
            block_rows = _round_up(rows8 // 2, 8)   # even 2-step grid: both TCs
            grid = 2
        else:
            block_rows = rows8                      # single step, no forced split
            grid = 1
    else:
        block_rows = cap
        grid = -(-rows8 // block_rows)
        if cfg["num_tc"] >= 2 and grid % 2 != 0:
            grid += 1                               # keep both v7x TCs busy

    rows_padded = grid * block_rows
    return block_rows, grid, rows_padded


# ----------------------------------------------------------------------------
# One-time weight packing (hoisted out of the per-call path).
# ----------------------------------------------------------------------------
def _block_diag(w, pack):
    """(fin, fout) -> block-diagonal (pack*fin, pack*fout)."""
    if pack == 1:
        return w
    fin, fout = w.shape
    eye = jnp.eye(pack, dtype=w.dtype)
    return jnp.einsum("pq,io->piqo", eye, w).reshape(pack * fin, pack * fout)


def _tile_bias(b, pack):
    """(1, fout) -> (1, pack*fout) (bias repeated per packed sample)."""
    return b if pack == 1 else jnp.tile(b, (1, pack))


def prepare_packed_params(params, input_dim, dtype=jnp.float32):
    """Precompute lane-dense packed weights once (cache & reuse across calls)."""
    if input_dim < 128 and 128 % input_dim == 0:
        pack = 128 // input_dim
    else:
        pack = 1  # TODO(synk): pad the feature dim to a multiple of 128 for the
        #            general case; full-array last-dim blocks are still legal.

    packed = {"pack": pack, "input_dim": input_dim}
    total_bytes = 0
    for i in (1, 2, 3, 4):
        w = _block_diag(params[f"w{i}"].astype(dtype), pack)
        b = _tile_bias(params[f"b{i}"].astype(dtype), pack)
        packed[f"w{i}"] = w
        packed[f"b{i}"] = b
        total_bytes += w.size * w.dtype.itemsize + b.size * b.dtype.itemsize
    packed["bytes"] = int(total_bytes)
    return packed


# ----------------------------------------------------------------------------
# Forward pass: reshape + single fused pallas_call.
# ----------------------------------------------------------------------------
def autoencoder_forward(x, packed):
    """Fused 4-layer MLP autoencoder as a single Pallas kernel.

    x:      (B, input_dim) float32
    packed: output of prepare_packed_params (weights as (in, out), biases (1, out))
    """
    B, input_dim = x.shape
    assert input_dim == packed["input_dim"]
    pack = packed["pack"]
    cfg = _tpu_config()

    # --- lane-dense packing: fold `pack` samples into one 128-wide lane row ---
    B_pad = _round_up(B, pack)
    if B_pad != B:
        x = jnp.pad(x, ((0, B_pad - B), (0, 0)))
    rows = B_pad // pack
    lane = input_dim * pack
    x_p = x.reshape(rows, lane)  # row-major contiguous -> free reshape

    # --- cdiv-based batch tiling with wrapper-side padding --------------------
    block_rows, grid_steps, rows_padded = _choose_tiling(
        rows, lane, x.dtype.itemsize, packed["bytes"], cfg)
    if rows_padded != rows:
        x_p = jnp.pad(x_p, ((0, rows_padded - rows), (0, 0)))

    def invariant(arr):
        # small grid-invariant operand: full-array block, constant index map
        return pl.BlockSpec(arr.shape, lambda i: (0, 0))

    out_p = pl.pallas_call(
        _autoencoder_kernel,
        out_shape=jax.ShapeDtypeStruct((rows_padded, lane), x.dtype),
        grid=(grid_steps,),
        in_specs=[
            pl.BlockSpec((block_rows, lane), lambda i: (i, 0)),
            invariant(packed["w1"]), invariant(packed["b1"]),
            invariant(packed["w2"]), invariant(packed["b2"]),
            invariant(packed["w3"]), invariant(packed["b3"]),
            invariant(packed["w4"]), invariant(packed["b4"]),
        ],
        out_specs=pl.BlockSpec((block_rows, lane), lambda i: (i, 0)),
        compiler_params=pltpu.CompilerParams(
            dimension_semantics=("parallel",),
            vmem_limit_bytes=int(cfg["vmem_limit"])),
    )(x_p,
      packed["w1"], packed["b1"], packed["w2"], packed["b2"],
      packed["w3"], packed["b3"], packed["w4"], packed["b4"])

    out = out_p[:rows].reshape(B_pad, input_dim)
    return out[:B] if B_pad != B else out


# ----------------------------------------------------------------------------
# Parameter init (mimics torch.nn.Linear default U(-1/sqrt(fan_in), +...)).
# ----------------------------------------------------------------------------
def init_linear(key, fan_in, fan_out):
    kw, kb = jax.random.split(key)
    bound = 1.0 / jnp.sqrt(fan_in)
    w = jax.random.uniform(kw, (fan_in, fan_out), jnp.float32, -bound, bound)
    b = jax.random.uniform(kb, (1, fan_out), jnp.float32, -bound, bound)
    return w, b


def make_params(key, input_dim, encoding_dim):
    k1, k2, k3, k4 = jax.random.split(key, 4)
    w1, b1 = init_linear(k1, input_dim, encoding_dim * 2)
    w2, b2 = init_linear(k2, encoding_dim * 2, encoding_dim)
    w3, b3 = init_linear(k3, encoding_dim, encoding_dim * 2)
    w4, b4 = init_linear(k4, encoding_dim * 2, input_dim)
    return {"w1": w1, "b1": b1, "w2": w2, "b2": b2,
            "w3": w3, "b3": b3, "w4": w4, "b4": b4}


def reference_forward(x, p):
    h = jnp.maximum(x @ p["w1"] + p["b1"], 0.0)
    h = jnp.maximum(h @ p["w2"] + p["b2"], 0.0)
    h = jnp.maximum(h @ p["w3"] + p["b3"], 0.0)
    return jax.nn.sigmoid(h @ p["w4"] + p["b4"])


if __name__ == "__main__":
    key = jax.random.PRNGKey(0)
    k_params, k_x = jax.random.split(key)

    batch = 512
    input_dim = 32
    encoding_dim = 8

    params = make_params(k_params, input_dim, encoding_dim)
    packed = prepare_packed_params(params, input_dim)   # hoisted, one-time

    # Main check: aligned batch.
    x = jax.random.uniform(k_x, (batch, input_dim), jnp.float32)
    out = jax.block_until_ready(autoencoder_forward(x, packed))
    ref = reference_forward(x, params)
    assert out.shape == (batch, input_dim)
    assert jnp.allclose(out, ref, atol=1e-5, rtol=1e-5)

    # Secondary check: awkward batch exercising the cdiv/padding path.
    x2 = x[:509]
    out2 = jax.block_until_ready(autoencoder_forward(x2, packed))
    ref2 = reference_forward(x2, params)
    assert out2.shape == (509, input_dim)
    assert jnp.allclose(out2, ref2, atol=1e-5, rtol=1e-5)

    print("KERNEL_OK")
</pallas_src>

<mosaic_0001>
module attributes {stable_mosaic.version = 11 : i64} {
  func.func @_autoencoder_kernel(%arg0: i32, %arg1: memref<128x128xf32, #tpu.memory_space<vmem>>, %arg2: memref<128x64xf32, #tpu.memory_space<vmem>>, %arg3: memref<1x64xf32, #tpu.memory_space<vmem>>, %arg4: memref<64x32xf32, #tpu.memory_space<vmem>>, %arg5: memref<1x32xf32, #tpu.memory_space<vmem>>, %arg6: memref<32x64xf32, #tpu.memory_space<vmem>>, %arg7: memref<1x64xf32, #tpu.memory_space<vmem>>, %arg8: memref<64x128xf32, #tpu.memory_space<vmem>>, %arg9: memref<1x128xf32, #tpu.memory_space<vmem>>, %arg10: memref<128x128xf32, #tpu.memory_space<vmem>>) attributes {dimension_semantics = [#tpu.dimension_semantics<parallel>], iteration_bounds = array<i64: 1>, scalar_prefetch = 0 : i64, scratch_operands = 0 : i64, tpu.core_type = #tpu.core_type<tc>, window_params = [{transform_indices = @transform_0, window_bounds = array<i64: 128, 128>}, {pipeline_mode = #tpu.pipeline_mode<synchronous>, transform_indices = @transform_1, window_bounds = array<i64: 128, 64>}, {pipeline_mode = #tpu.pipeline_mode<synchronous>, transform_indices = @transform_2, window_bounds = array<i64: 1, 64>}, {pipeline_mode = #tpu.pipeline_mode<synchronous>, transform_indices = @transform_3, window_bounds = array<i64: 64, 32>}, {pipeline_mode = #tpu.pipeline_mode<synchronous>, transform_indices = @transform_4, window_bounds = array<i64: 1, 32>}, {pipeline_mode = #tpu.pipeline_mode<synchronous>, transform_indices = @transform_5, window_bounds = array<i64: 32, 64>}, {pipeline_mode = #tpu.pipeline_mode<synchronous>, transform_indices = @transform_6, window_bounds = array<i64: 1, 64>}, {pipeline_mode = #tpu.pipeline_mode<synchronous>, transform_indices = @transform_7, window_bounds = array<i64: 64, 128>}, {pipeline_mode = #tpu.pipeline_mode<synchronous>, transform_indices = @transform_8, window_bounds = array<i64: 1, 128>}, {transform_indices = @transform_9, window_bounds = array<i64: 128, 128>}]} {
    %c0 = arith.constant 0 : index
    %c0_0 = arith.constant 0 : index
    %0 = vector.load %arg1[%c0, %c0_0] : memref<128x128xf32, #tpu.memory_space<vmem>>, vector<128x128xf32>
    %c0_1 = arith.constant 0 : index
    %c0_2 = arith.constant 0 : index
    %1 = vector.load %arg2[%c0_1, %c0_2] : memref<128x64xf32, #tpu.memory_space<vmem>>, vector<128x64xf32>
    %cst = arith.constant dense<0.000000e+00> : vector<128x64xf32>
    %2 = tpu.matmul %0, %1, %cst {dimension_numbers = #tpu.dot_dimension_numbers<[1], [0], [0], [1], [0, 0, 1, 1], [], []>} : vector<128x128xf32>, vector<128x64xf32>, vector<128x64xf32> -> vector<128x64xf32>
    %c0_3 = arith.constant 0 : index
    %c0_4 = arith.constant 0 : index
    %3 = vector.load %arg3[%c0_3, %c0_4] : memref<1x64xf32, #tpu.memory_space<vmem>>, vector<1x64xf32>
    %4 = vector.broadcast %3 : vector<1x64xf32> to vector<128x64xf32>
    %5 = arith.addf %2, %4 : vector<128x64xf32>
    %cst_5 = arith.constant 0.000000e+00 : f32
    %6 = vector.broadcast %cst_5 : f32 to vector<128x64xf32>
    %7 = arith.maximumf %5, %6 : vector<128x64xf32>
    %c0_6 = arith.constant 0 : index
    %c0_7 = arith.constant 0 : index
    %8 = vector.load %arg4[%c0_6, %c0_7] : memref<64x32xf32, #tpu.memory_space<vmem>>, vector<64x32xf32>
    %cst_8 = arith.constant dense<0.000000e+00> : vector<128x32xf32>
    %9 = tpu.matmul %7, %8, %cst_8 {dimension_numbers = #tpu.dot_dimension_numbers<[1], [0], [0], [1], [0, 0, 1, 1], [], []>} : vector<128x64xf32>, vector<64x32xf32>, vector<128x32xf32> -> vector<128x32xf32>
    %c0_9 = arith.constant 0 : index
    %c0_10 = arith.constant 0 : index
    %10 = vector.load %arg5[%c0_9, %c0_10] : memref<1x32xf32, #tpu.memory_space<vmem>>, vector<1x32xf32>
    %11 = vector.broadcast %10 : vector<1x32xf32> to vector<128x32xf32>
    %12 = arith.addf %9, %11 : vector<128x32xf32>
    %cst_11 = arith.constant 0.000000e+00 : f32
    %13 = vector.broadcast %cst_11 : f32 to vector<128x32xf32>
    %14 = arith.maximumf %12, %13 : vector<128x32xf32>
    %c0_12 = arith.constant 0 : index
    %c0_13 = arith.constant 0 : index
    %15 = vector.load %arg6[%c0_12, %c0_13] : memref<32x64xf32, #tpu.memory_space<vmem>>, vector<32x64xf32>
    %cst_14 = arith.constant dense<0.000000e+00> : vector<128x64xf32>
    %16 = tpu.matmul %14, %15, %cst_14 {dimension_numbers = #tpu.dot_dimension_numbers<[1], [0], [0], [1], [0, 0, 1, 1], [], []>} : vector<128x32xf32>, vector<32x64xf32>, vector<128x64xf32> -> vector<128x64xf32>
    %c0_15 = arith.constant 0 : index
    %c0_16 = arith.constant 0 : index
    %17 = vector.load %arg7[%c0_15, %c0_16] : memref<1x64xf32, #tpu.memory_space<vmem>>, vector<1x64xf32>
    %18 = vector.broadcast %17 : vector<1x64xf32> to vector<128x64xf32>
    %19 = arith.addf %16, %18 : vector<128x64xf32>
    %cst_17 = arith.constant 0.000000e+00 : f32
    %20 = vector.broadcast %cst_17 : f32 to vector<128x64xf32>
    %21 = arith.maximumf %19, %20 : vector<128x64xf32>
    %c0_18 = arith.constant 0 : index
    %c0_19 = arith.constant 0 : index
    %22 = vector.load %arg8[%c0_18, %c0_19] : memref<64x128xf32, #tpu.memory_space<vmem>>, vector<64x128xf32>
    %cst_20 = arith.constant dense<0.000000e+00> : vector<128x128xf32>
    %23 = tpu.matmul %21, %22, %cst_20 {dimension_numbers = #tpu.dot_dimension_numbers<[1], [0], [0], [1], [0, 0, 1, 1], [], []>} : vector<128x64xf32>, vector<64x128xf32>, vector<128x128xf32> -> vector<128x128xf32>
    %c0_21 = arith.constant 0 : index
    %c0_22 = arith.constant 0 : index
    %24 = vector.load %arg9[%c0_21, %c0_22] : memref<1x128xf32, #tpu.memory_space<vmem>>, vector<1x128xf32>
    %25 = vector.broadcast %24 : vector<1x128xf32> to vector<128x128xf32>
    %26 = arith.addf %23, %25 : vector<128x128xf32>
    %27 = arith.negf %26 : vector<128x128xf32>
    %28 = math.exp %27 : vector<128x128xf32>
    %cst_23 = arith.constant 1.000000e+00 : f32
    %29 = vector.broadcast %cst_23 : f32 to vector<128x128xf32>
    %30 = arith.addf %29, %28 : vector<128x128xf32>
    %31 = arith.divf %29, %30 : vector<128x128xf32>
    %c0_24 = arith.constant 0 : index
    %c0_25 = arith.constant 0 : index
    %32 = vector.load %arg10[%c0_24, %c0_25] : memref<128x128xf32, #tpu.memory_space<vmem>>, vector<128x128xf32>
    tpu.vector_store %arg10[%c0_24, %c0_25], %31 {strides = array<i32>} : memref<128x128xf32, #tpu.memory_space<vmem>>, vector<128x128xf32>,
    return
  }
  func.func @transform_0(%arg0: i32) -> (i32, i32) {
    %c0_i32 = arith.constant 0 : i32
    %c0_i32_0 = arith.constant 0 : i32
    return %arg0, %c0_i32 : i32, i32
  }
  func.func @transform_1(%arg0: i32) -> (i32, i32) {
    %c0_i32 = arith.constant 0 : i32
    %c0_i32_0 = arith.constant 0 : i32
    %c0_i32_1 = arith.constant 0 : i32
    return %c0_i32, %c0_i32_0 : i32, i32
  }
  func.func @transform_2(%arg0: i32) -> (i32, i32) {
    %c0_i32 = arith.constant 0 : i32
    %c0_i32_0 = arith.constant 0 : i32
    %c0_i32_1 = arith.constant 0 : i32
    return %c0_i32, %c0_i32_0 : i32, i32
  }
  func.func @transform_3(%arg0: i32) -> (i32, i32) {
    %c0_i32 = arith.constant 0 : i32
    %c0_i32_0 = arith.constant 0 : i32
    %c0_i32_1 = arith.constant 0 : i32
    return %c0_i32, %c0_i32_0 : i32, i32
  }
  func.func @transform_4(%arg0: i32) -> (i32, i32) {
    %c0_i32 = arith.constant 0 : i32
    %c0_i32_0 = arith.constant 0 : i32
    %c0_i32_1 = arith.constant 0 : i32
    return %c0_i32, %c0_i32_0 : i32, i32
  }
  func.func @transform_5(%arg0: i32) -> (i32, i32) {
    %c0_i32 = arith.constant 0 : i32
    %c0_i32_0 = arith.constant 0 : i32
    %c0_i32_1 = arith.constant 0 : i32
    return %c0_i32, %c0_i32_0 : i32, i32
  }
  func.func @transform_6(%arg0: i32) -> (i32, i32) {
    %c0_i32 = arith.constant 0 : i32
    %c0_i32_0 = arith.constant 0 : i32
    %c0_i32_1 = arith.constant 0 : i32
    return %c0_i32, %c0_i32_0 : i32, i32
  }
  func.func @transform_7(%arg0: i32) -> (i32, i32) {
    %c0_i32 = arith.constant 0 : i32
    %c0_i32_0 = arith.constant 0 : i32
    %c0_i32_1 = arith.constant 0 : i32
    return %c0_i32, %c0_i32_0 : i32, i32
  }
  func.func @transform_8(%arg0: i32) -> (i32, i32) {
    %c0_i32 = arith.constant 0 : i32
    %c0_i32_0 = arith.constant 0 : i32
    %c0_i32_1 = arith.constant 0 : i32
    return %c0_i32, %c0_i32_0 : i32, i32
  }
  func.func @transform_9(%arg0: i32) -> (i32, i32) {
    %c0_i32 = arith.constant 0 : i32
    %c0_i32_0 = arith.constant 0 : i32
    return %arg0, %c0_i32 : i32, i32
  }
}

</mosaic_0001>

<llo_original>
// kernel: tpu_custom_call.1
$region0: #{tpu_custom_call.1}
  #allocation0 [shape = 'u32[]', space=smem, size = 0x4, offset = 0x4, fixed_abs, tag = 'smem constant byte address 0x4 - core index']
  #allocation1 [shape = 'u32[144,128]{1,0:T(1,128)}', space=vmem, size = 0x12000, scoped, tag = 'internal scratch']
  %s0 = inlined_call_operand.vmem [shape: f32[128,128], index: 0, kind: input, shape index: {}]
  %s1 = inlined_call_operand.vmem [shape: f32[128,64], index: 1, kind: input, shape index: {}]
  %s2 = inlined_call_operand.vmem [shape: f32[1,64], index: 2, kind: input, shape index: {}]
  %s3 = inlined_call_operand.vmem [shape: f32[64,32], index: 3, kind: input, shape index: {}]
  %s4 = inlined_call_operand.vmem [shape: f32[1,32], index: 4, kind: input, shape index: {}]
  %s5 = inlined_call_operand.vmem [shape: f32[32,64], index: 5, kind: input, shape index: {}]
  %s6 = inlined_call_operand.vmem [shape: f32[1,64], index: 6, kind: input, shape index: {}]
  %s7 = inlined_call_operand.vmem [shape: f32[64,128], index: 7, kind: input, shape index: {}]
  %s8 = inlined_call_operand.vmem [shape: f32[1,128], index: 8, kind: input, shape index: {}]
  %s9 = inlined_call_operand.hbm [shape: f32[128,128], index: 9, kind: output, shape index: {}]
  %s10 = sld [smem:[#allocation0]]
  $region46: #{tpu_custom_call.1} parent=0
    _
  %s12 = ssub.s32 1, %s10
  %s13 = scalar_select 0, %s12, %s10
  $region1: #{tpu_custom_call.1} parent=0
    #allocation2 [shape = 'u8[65536]{0}', space=vmem, size = 0x10000, scoped, tag = 'output window, operand 0, single buffered']
    #allocation3 [shape = 's32[1]{0}', space=sflag, size = 0x4, scoped, tag = 'scoped memory for tpu_custom_call.1']
    %14 = vsyncpa [#allocation3], 0
    // Predicated region
    $region2: #{tpu_custom_call.1} parent=1 // pred_check
      _
    $region3: #{tpu_custom_call.1} parent=1 // pred_check_branch
      %16 = sbr.rel (0) target = $region5
    $region4: #{tpu_custom_call.1} parent=1 // pred_region
      _
    $region5: #{tpu_custom_call.1} parent=1 // pred_fallthru
      _
    // Predicated region
    $region6: #{tpu_custom_call.1} parent=1 // pred_check
      _
    $region7: #{tpu_custom_call.1} parent=1 // pred_check_branch
      %18 = sbr.rel (0) target = $region9
    $region8: #{tpu_custom_call.1} parent=1 // pred_region
      _
    $region9: #{tpu_custom_call.1} parent=1 // pred_fallthru
      _
    // Predicated region
    $region10: #{tpu_custom_call.1} parent=1 // pred_check
      _
    $region11: #{tpu_custom_call.1} parent=1 // pred_check_branch
      %20 = sbr.rel (0) target = $region13
    $region12: #{tpu_custom_call.1} parent=1 // pred_region
      _
    $region13: #{tpu_custom_call.1} parent=1 // pred_fallthru
      _
    // Predicated region
    $region14: #{tpu_custom_call.1} parent=1 // pred_check
      _
    $region15: #{tpu_custom_call.1} parent=1 // pred_check_branch
      %22 = sbr.rel (0) target = $region17
    $region16: #{tpu_custom_call.1} parent=1 // pred_region
      _
    $region17: #{tpu_custom_call.1} parent=1 // pred_fallthru
      _
    // Predicated region
    $region18: #{tpu_custom_call.1} parent=1 // pred_check
      _
    $region19: #{tpu_custom_call.1} parent=1 // pred_check_branch
      %24 = sbr.rel (0) target = $region21
    $region20: #{tpu_custom_call.1} parent=1 // pred_region
      _
    $region21: #{tpu_custom_call.1} parent=1 // pred_fallthru
      _
    // Predicated region
    $region22: #{tpu_custom_call.1} parent=1 // pred_check
      _
    $region23: #{tpu_custom_call.1} parent=1 // pred_check_branch
      %26 = sbr.rel (0) target = $region25
    $region24: #{tpu_custom_call.1} parent=1 // pred_region
      _
    $region25: #{tpu_custom_call.1} parent=1 // pred_fallthru
      _
    // Predicated region
    $region26: #{tpu_custom_call.1} parent=1 // pred_check
      _
    $region27: #{tpu_custom_call.1} parent=1 // pred_check_branch
      %28 = sbr.rel (0) target = $region29
    $region28: #{tpu_custom_call.1} parent=1 // pred_region
      _
    $region29: #{tpu_custom_call.1} parent=1 // pred_fallthru
      _
    // Predicated region
    $region30: #{tpu_custom_call.1} parent=1 // pred_check
      _
    $region31: #{tpu_custom_call.1} parent=1 // pred_check_branch
      %30 = sbr.rel (0) target = $region33
    $region32: #{tpu_custom_call.1} parent=1 // pred_region
      _
    $region33: #{tpu_custom_call.1} parent=1 // pred_fallthru
      _
    // Predicated region
    $region34: #{tpu_custom_call.1} parent=1 // pred_check
      _
    $region35: #{tpu_custom_call.1} parent=1 // pred_check_branch
      %32 = sbr.rel (0) target = $region37
    $region36: #{tpu_custom_call.1} parent=1 // pred_region
      _
    $region37: #{tpu_custom_call.1} parent=1 // pred_fallthru
      _
    %v33 = vld [vmem:[%s0] sm:$0xff]
    %v34 = vld [vmem:[%s0 + $0x8] sm:$0xff]
    %v35 = vld [vmem:[%s0 + $0x10] sm:$0xff]
    %v36 = vld [vmem:[%s0 + $0x18] sm:$0xff]
    %v37 = vld [vmem:[%s0 + $0x20] sm:$0xff]
    %v38 = vld [vmem:[%s0 + $0x28] sm:$0xff]
    %v39 = vld [vmem:[%s0 + $0x30] sm:$0xff]
    %v40 = vld [vmem:[%s0 + $0x38] sm:$0xff]
    %v41 = vld [vmem:[%s0 + $0x40] sm:$0xff]
    %v42 = vld [vmem:[%s0 + $0x48] sm:$0xff]
    %v43 = vld [vmem:[%s0 + $0x50] sm:$0xff]
    %v44 = vld [vmem:[%s0 + $0x58] sm:$0xff]
    %v45 = vld [vmem:[%s0 + $0x60] sm:$0xff]
    %v46 = vld [vmem:[%s0 + $0x68] sm:$0xff]
    %v47 = vld [vmem:[%s0 + $0x70] sm:$0xff]
    %v48 = vld [vmem:[%s0 + $0x78] sm:$0xff]
    %v49 = vld [vmem:[%s1] sm:$0xff]
    %v50 = vld [vmem:[%s1 + $0x8] sm:$0xff]
    %v51 = vld [vmem:[%s1 + $0x10] sm:$0xff]
    %v52 = vld [vmem:[%s1 + $0x18] sm:$0xff]
    %v53 = vld [vmem:[%s1 + $0x20] sm:$0xff]
    %v54 = vld [vmem:[%s1 + $0x28] sm:$0xff]
    %v55 = vld [vmem:[%s1 + $0x30] sm:$0xff]
    %v56 = vld [vmem:[%s1 + $0x38] sm:$0xff]
    %v57 = vld [vmem:[%s1 + $0x40] sm:$0xff]
    %v58 = vld [vmem:[%s1 + $0x48] sm:$0xff]
    %v59 = vld [vmem:[%s1 + $0x50] sm:$0xff]
    %v60 = vld [vmem:[%s1 + $0x58] sm:$0xff]
    %v61 = vld [vmem:[%s1 + $0x60] sm:$0xff]
    %v62 = vld [vmem:[%s1 + $0x68] sm:$0xff]
    %v63 = vld [vmem:[%s1 + $0x70] sm:$0xff]
    %v64 = vld [vmem:[%s1 + $0x78] sm:$0xff]
    %v65 = vld [vmem:[%s2] sm:$0x1]
    %v67 = vlaneseq
    %v68 = vshrl.u32 %v67, 7
    %v69 = vsub.s32 0, %v68
    %v70 = vrot.slane %v65, %v69
    %72 = vmatprep.subr.mxu0 0.0
    %73 = vmatpush1.msra.mxu0 %v49
    %74 = vmatprep.subr.mxu0 0.0
    %75 = vmatpush1.msra.mxu0 %v50
    %76 = vmatprep.subr.mxu0 0.0
    %77 = vmatpush1.msra.mxu0 %v51
    %78 = vmatprep.subr.mxu0 0.0
    %79 = vmatpush1.msra.mxu0 %v52
    %80 = vmatprep.subr.mxu0 0.0
    %81 = vmatpush1.msra.mxu0 %v53
    %82 = vmatprep.subr.mxu0 0.0
    %83 = vmatpush1.msra.mxu0 %v54
    %84 = vmatprep.subr.mxu0 0.0
    %85 = vmatpush1.msra.mxu0 %v55
    %86 = vmatprep.subr.mxu0 0.0
    %87 = vmatpush1.msra.mxu0 %v56
    %88 = vmatprep.subr.mxu0 0.0
    %89 = vmatpush1.msra.mxu0 %v57
    %90 = vmatprep.subr.mxu0 0.0
    %91 = vmatpush1.msra.mxu0 %v58
    %92 = vmatprep.subr.mxu0 0.0
    %93 = vmatpush1.msra.mxu0 %v59
    %94 = vmatprep.subr.mxu0 0.0
    %95 = vmatpush1.msra.mxu0 %v60
    %96 = vmatprep.subr.mxu0 0.0
    %97 = vmatpush1.msra.mxu0 %v61
    %98 = vmatprep.subr.mxu0 0.0
    %99 = vmatpush1.msra.mxu0 %v62
    %100 = vmatprep.subr.mxu0 0.0
    %101 = vmatpush1.msra.mxu0 %v63
    %102 = vmatprep.subr.mxu0 0.0
    %103 = vmatpush1.msra.mxu0 %v64
    %104 = vmatprep.subr.mxu0 0.0
    %105 = vmatpush1.msra.mxu0 0.0
    %106 = vmatprep.subr.mxu0 0.0
    %107 = vmatpush1.msra.mxu0 0.0
    %108 = vmatprep.subr.mxu0 0.0
    %109 = vmatpush1.msra.mxu0 0.0
    %110 = vmatprep.subr.mxu0 0.0
    %111 = vmatpush1.msra.mxu0 0.0
    %112 = vmatprep.subr.mxu0 0.0
    %113 = vmatpush1.msra.mxu0 0.0
    %114 = vmatprep.subr.mxu0 0.0
    %115 = vmatpush1.msra.mxu0 0.0
    %116 = vmatprep.subr.mxu0 0.0
    %117 = vmatpush1.msra.mxu0 0.0
    %118 = vmatprep.subr.mxu0 0.0
    %119 = vmatpush1.msra.mxu0 0.0
    %120 = vmatprep.subr.mxu0 0.0
    %121 = vmatpush1.msra.mxu0 0.0
    %122 = vmatprep.subr.mxu0 0.0
    %123 = vmatpush1.msra.mxu0 0.0
    %124 = vmatprep.subr.mxu0 0.0
    %125 = vmatpush1.msra.mxu0 0.0
    %126 = vmatprep.subr.mxu0 0.0
    %127 = vmatpush1.msra.mxu0 0.0
    %128 = vmatprep.subr.mxu0 0.0
    %129 = vmatpush1.msra.mxu0 0.0
    %130 = vmatprep.subr.mxu0 0.0
    %131 = vmatpush1.msra.mxu0 0.0
    %132 = vmatprep.subr.mxu0 0.0
    %133 = vmatpush1.msra.mxu0 0.0
    %134 = vmatprep.subr.mxu0 0.0
    %135 = vmatpush1.msra.mxu0 0.0
    %136 = vmatprep.mubr.f32.mxu0 0.0
    %137 = vmatmul.mubr.f32.gmra.mrb[0].mxu0 %v33
    %v138 = vpop.f32.mrb[0].mxu0
    %v139 = vadd.f32 %v70, %v138
    %v140 = vpop.f32.mrb[0].mxu0
    %141 = vmatprep.mubr.f32.mxu0 0.0
    %142 = vmatmul.mubr.f32.gmra.mrb[0].mxu0 %v34
    %v143 = vpop.f32.mrb[0].mxu0
    %v144 = vadd.f32 %v70, %v143
    %v145 = vpop.f32.mrb[0].mxu0
    %146 = vmatprep.mubr.f32.mxu0 0.0
    %147 = vmatmul.mubr.f32.gmra.mrb[0].mxu0 %v35
    %v148 = vpop.f32.mrb[0].mxu0
    %v149 = vadd.f32 %v70, %v148
    %v150 = vpop.f32.mrb[0].mxu0
    %151 = vmatprep.mubr.f32.mxu0 0.0
    %152 = vmatmul.mubr.f32.gmra.mrb[0].mxu0 %v36
    %v153 = vpop.f32.mrb[0].mxu0
    %v154 = vadd.f32 %v70, %v153
    %v155 = vpop.f32.mrb[0].mxu0
    %156 = vmatprep.mubr.f32.mxu0 0.0
    %157 = vmatmul.mubr.f32.gmra.mrb[0].mxu0 %v37
    %v158 = vpop.f32.mrb[0].mxu0
    %v159 = vadd.f32 %v70, %v158
    %v160 = vpop.f32.mrb[0].mxu0
    %161 = vmatprep.mubr.f32.mxu0 0.0
    %162 = vmatmul.mubr.f32.gmra.mrb[0].mxu0 %v38
    %v163 = vpop.f32.mrb[0].mxu0
    %v164 = vadd.f32 %v70, %v163
    %v165 = vpop.f32.mrb[0].mxu0
    %166 = vmatprep.mubr.f32.mxu0 0.0
    %167 = vmatmul.mubr.f32.gmra.mrb[0].mxu0 %v39
    %v168 = vpop.f32.mrb[0].mxu0
    %v169 = vadd.f32 %v70, %v168
    %v170 = vpop.f32.mrb[0].mxu0
    %171 = vmatprep.mubr.f32.mxu0 0.0
    %172 = vmatmul.mubr.f32.gmra.mrb[0].mxu0 %v40
    %v173 = vpop.f32.mrb[0].mxu0
    %v174 = vadd.f32 %v70, %v173
    %v175 = vpop.f32.mrb[0].mxu0
    %176 = vmatprep.mubr.f32.mxu0 0.0
    %177 = vmatmul.mubr.f32.gmra.mrb[0].mxu0 %v41
    %v178 = vpop.f32.mrb[0].mxu0
    %v179 = vadd.f32 %v70, %v178
    %v180 = vpop.f32.mrb[0].mxu0
    %181 = vmatprep.mubr.f32.mxu0 0.0
    %182 = vmatmul.mubr.f32.gmra.mrb[0].mxu0 %v42
    %v183 = vpop.f32.mrb[0].mxu0
    %v184 = vadd.f32 %v70, %v183
    %v185 = vpop.f32.mrb[0].mxu0
    %186 = vmatprep.mubr.f32.mxu0 0.0
    %187 = vmatmul.mubr.f32.gmra.mrb[0].mxu0 %v43
    %v188 = vpop.f32.mrb[0].mxu0
    %v189 = vadd.f32 %v70, %v188
    %v190 = vpop.f32.mrb[0].mxu0
    %191 = vmatprep.mubr.f32.mxu0 0.0
    %192 = vmatmul.mubr.f32.gmra.mrb[0].mxu0 %v44
    %v193 = vpop.f32.mrb[0].mxu0
    %v194 = vadd.f32 %v70, %v193
    %v195 = vpop.f32.mrb[0].mxu0
    %196 = vmatprep.mubr.f32.mxu0 0.0
    %197 = vmatmul.mubr.f32.gmra.mrb[0].mxu0 %v45
    %v198 = vpop.f32.mrb[0].mxu0
    %v199 = vadd.f32 %v70, %v198
    %v200 = vpop.f32.mrb[0].mxu0
    %201 = vmatprep.mubr.f32.mxu0 0.0
    %202 = vmatmul.mubr.f32.gmra.mrb[0].mxu0 %v46
    %v203 = vpop.f32.mrb[0].mxu0
    %v204 = vadd.f32 %v70, %v203
    %v205 = vpop.f32.mrb[0].mxu0
    %206 = vmatprep.mubr.f32.mxu0 0.0
    %207 = vmatmul.mubr.f32.gmra.mrb[0].mxu0 %v47
    %v208 = vpop.f32.mrb[0].mxu0
    %v209 = vadd.f32 %v70, %v208
    %v210 = vpop.f32.mrb[0].mxu0
    %211 = vmatprep.mubr.f32.mxu0 0.0
    %212 = vmatmul.mubr.f32.gmra.mrb[0].mxu0 %v48
    %v213 = vpop.f32.mrb[0].mxu0
    %v214 = vadd.f32 %v70, %v213
    %v215 = vpop.f32.mrb[0].mxu0
    %216 = vdwg.mxu0
    %v217 = vmax.f32 %v139, 0.0
    %v218 = vmax.f32 %v144, 0.0
    %v219 = vmax.f32 %v149, 0.0
    %v220 = vmax.f32 %v154, 0.0
    %v221 = vmax.f32 %v159, 0.0
    %v222 = vmax.f32 %v164, 0.0
    %v223 = vmax.f32 %v169, 0.0
    %v224 = vmax.f32 %v174, 0.0
    %v225 = vmax.f32 %v179, 0.0
    %v226 = vmax.f32 %v184, 0.0
    %v227 = vmax.f32 %v189, 0.0
    %v228 = vmax.f32 %v194, 0.0
    %v229 = vmax.f32 %v199, 0.0
    %v230 = vmax.f32 %v204, 0.0
    %v231 = vmax.f32 %v209, 0.0
    %v232 = vmax.f32 %v214, 0.0
    %v233 = vld [vmem:[%s3] sm:$0xff]
    %v234 = vld [vmem:[%s3 + $0x8] sm:$0xff]
    %v235 = vld [vmem:[%s3 + $0x10] sm:$0xff]
    %v236 = vld [vmem:[%s3 + $0x18] sm:$0xff]
    %v237 = vld [vmem:[%s3 + $0x20] sm:$0xff]
    %v238 = vld [vmem:[%s3 + $0x28] sm:$0xff]
    %v239 = vld [vmem:[%s3 + $0x30] sm:$0xff]
    %v240 = vld [vmem:[%s3 + $0x38] sm:$0xff]
    %v241 = vld [vmem:[%s4] sm:$0x1]
    %v243 = vlaneseq
    %v244 = vshrl.u32 %v243, 7
    %v245 = vsub.s32 0, %v244
    %v246 = vrot.slane %v241, %v245
    %vm248 = vcmask 523264
    %v250 = vsel %vm248, %v217, 0
    %v253 = vsel %vm248, %v218, 0
    %v256 = vsel %vm248, %v219, 0
    %v259 = vsel %vm248, %v220, 0
    %v262 = vsel %vm248, %v221, 0
    %v265 = vsel %vm248, %v222, 0
    %v268 = vsel %vm248, %v223, 0
    %v271 = vsel %vm248, %v224, 0
    %v274 = vsel %vm248, %v225, 0
    %v277 = vsel %vm248, %v226, 0
    %v280 = vsel %vm248, %v227, 0
    %v283 = vsel %vm248, %v228, 0
    %v286 = vsel %vm248, %v229, 0
    %v289 = vsel %vm248, %v230, 0
    %v292 = vsel %vm248, %v231, 0
    %v295 = vsel %vm248, %v232, 0
    %297 = vmatprep.subr.mxu0 0.0
    %298 = vmatpush1.msra.mxu0 %v233
    %299 = vmatprep.subr.mxu0 0.0
    %300 = vmatpush1.msra.mxu0 %v234
    %301 = vmatprep.subr.mxu0 0.0
    %302 = vmatpush1.msra.mxu0 %v235
    %303 = vmatprep.subr.mxu0 0.0
    %304 = vmatpush1.msra.mxu0 %v236
    %305 = vmatprep.subr.mxu0 0.0
    %306 = vmatpush1.msra.mxu0 %v237
    %307 = vmatprep.subr.mxu0 0.0
    %308 = vmatpush1.msra.mxu0 %v238
    %309 = vmatprep.subr.mxu0 0.0
    %310 = vmatpush1.msra.mxu0 %v239
    %311 = vmatprep.subr.mxu0 0.0
    %312 = vmatpush1.msra.mxu0 %v240
    %313 = vmatprep.subr.mxu0 0.0
    %314 = vmatpush1.msra.mxu0 0.0
    %315 = vmatprep.subr.mxu0 0.0
    %316 = vmatpush1.msra.mxu0 0.0
    %317 = vmatprep.subr.mxu0 0.0
    %318 = vmatpush1.msra.mxu0 0.0
    %319 = vmatprep.subr.mxu0 0.0
    %320 = vmatpush1.msra.mxu0 0.0
    %321 = vmatprep.subr.mxu0 0.0
    %322 = vmatpush1.msra.mxu0 0.0
    %323 = vmatprep.subr.mxu0 0.0
    %324 = vmatpush1.msra.mxu0 0.0
    %325 = vmatprep.subr.mxu0 0.0
    %326 = vmatpush1.msra.mxu0 0.0
    %327 = vmatprep.subr.mxu0 0.0
    %328 = vmatpush1.msra.mxu0 0.0
    %329 = vmatprep.subr.mxu0 0.0
    %330 = vmatpush1.msra.mxu0 0.0
    %331 = vmatprep.subr.mxu0 0.0
    %332 = vmatpush1.msra.mxu0 0.0
    %333 = vmatprep.subr.mxu0 0.0
    %334 = vmatpush1.msra.mxu0 0.0
    %335 = vmatprep.subr.mxu0 0.0
    %336 = vmatpush1.msra.mxu0 0.0
    %337 = vmatprep.subr.mxu0 0.0
    %338 = vmatpush1.msra.mxu0 0.0
    %339 = vmatprep.subr.mxu0 0.0
    %340 = vmatpush1.msra.mxu0 0.0
    %341 = vmatprep.subr.mxu0 0.0
    %342 = vmatpush1.msra.mxu0 0.0
    %343 = vmatprep.subr.mxu0 0.0
    %344 = vmatpush1.msra.mxu0 0.0
    %345 = vmatprep.subr.mxu0 0.0
    %346 = vmatpush1.msra.mxu0 0.0
    %347 = vmatprep.subr.mxu0 0.0
    %348 = vmatpush1.msra.mxu0 0.0
    %349 = vmatprep.subr.mxu0 0.0
    %350 = vmatpush1.msra.mxu0 0.0
    %351 = vmatprep.subr.mxu0 0.0
    %352 = vmatpush1.msra.mxu0 0.0
    %353 = vmatprep.subr.mxu0 0.0
    %354 = vmatpush1.msra.mxu0 0.0
    %355 = vmatprep.subr.mxu0 0.0
    %356 = vmatpush1.msra.mxu0 0.0
    %357 = vmatprep.subr.mxu0 0.0
    %358 = vmatpush1.msra.mxu0 0.0
    %359 = vmatprep.subr.mxu0 0.0
    %360 = vmatpush1.msra.mxu0 0.0
    %361 = vmatprep.mubr.f32.mxu0 0.0
    %362 = vmatmul.mubr.f32.gmra.mrb[0].mxu0 %v250
    %v363 = vpop.f32.mrb[0].mxu0
    %v364 = vadd.f32 %v246, %v363
    %v365 = vpop.f32.mrb[0].mxu0
    %366 = vmatprep.mubr.f32.mxu0 0.0
    %367 = vmatmul.mubr.f32.gmra.mrb[0].mxu0 %v253
    %v368 = vpop.f32.mrb[0].mxu0
    %v369 = vadd.f32 %v246, %v368
    %v370 = vpop.f32.mrb[0].mxu0
    %371 = vmatprep.mubr.f32.mxu0 0.0
    %372 = vmatmul.mubr.f32.gmra.mrb[0].mxu0 %v256
    %v373 = vpop.f32.mrb[0].mxu0
    %v374 = vadd.f32 %v246, %v373
    %v375 = vpop.f32.mrb[0].mxu0
    %376 = vmatprep.mubr.f32.mxu0 0.0
    %377 = vmatmul.mubr.f32.gmra.mrb[0].mxu0 %v259
    %v378 = vpop.f32.mrb[0].mxu0
    %v379 = vadd.f32 %v246, %v378
    %v380 = vpop.f32.mrb[0].mxu0
    %381 = vmatprep.mubr.f32.mxu0 0.0
    %382 = vmatmul.mubr.f32.gmra.mrb[0].mxu0 %v262
    %v383 = vpop.f32.mrb[0].mxu0
    %v384 = vadd.f32 %v246, %v383
    %v385 = vpop.f32.mrb[0].mxu0
    %386 = vmatprep.mubr.f32.mxu0 0.0
    %387 = vmatmul.mubr.f32.gmra.mrb[0].mxu0 %v265
    %v388 = vpop.f32.mrb[0].mxu0
    %v389 = vadd.f32 %v246, %v388
    %v390 = vpop.f32.mrb[0].mxu0
    %391 = vmatprep.mubr.f32.mxu0 0.0
    %392 = vmatmul.mubr.f32.gmra.mrb[0].mxu0 %v268
    %v393 = vpop.f32.mrb[0].mxu0
    %v394 = vadd.f32 %v246, %v393
    %v395 = vpop.f32.mrb[0].mxu0
    %396 = vmatprep.mubr.f32.mxu0 0.0
    %397 = vmatmul.mubr.f32.gmra.mrb[0].mxu0 %v271
    %v398 = vpop.f32.mrb[0].mxu0
    %v399 = vadd.f32 %v246, %v398
    %v400 = vpop.f32.mrb[0].mxu0
    %401 = vmatprep.mubr.f32.mxu0 0.0
    %402 = vmatmul.mubr.f32.gmra.mrb[0].mxu0 %v274
    %v403 = vpop.f32.mrb[0].mxu0
    %v404 = vadd.f32 %v246, %v403
    %v405 = vpop.f32.mrb[0].mxu0
    %406 = vmatprep.mubr.f32.mxu0 0.0
    %407 = vmatmul.mubr.f32.gmra.mrb[0].mxu0 %v277
    %v408 = vpop.f32.mrb[0].mxu0
    %v409 = vadd.f32 %v246, %v408
    %v410 = vpop.f32.mrb[0].mxu0
    %411 = vmatprep.mubr.f32.mxu0 0.0
    %412 = vmatmul.mubr.f32.gmra.mrb[0].mxu0 %v280
    %v413 = vpop.f32.mrb[0].mxu0
    %v414 = vadd.f32 %v246, %v413
    %v415 = vpop.f32.mrb[0].mxu0
    %416 = vmatprep.mubr.f32.mxu0 0.0
    %417 = vmatmul.mubr.f32.gmra.mrb[0].mxu0 %v283
    %v418 = vpop.f32.mrb[0].mxu0
    %v419 = vadd.f32 %v246, %v418
    %v420 = vpop.f32.mrb[0].mxu0
    %421 = vmatprep.mubr.f32.mxu0 0.0
    %422 = vmatmul.mubr.f32.gmra.mrb[0].mxu0 %v286
    %v423 = vpop.f32.mrb[0].mxu0
    %v424 = vadd.f32 %v246, %v423
    %v425 = vpop.f32.mrb[0].mxu0
    %426 = vmatprep.mubr.f32.mxu0 0.0
    %427 = vmatmul.mubr.f32.gmra.mrb[0].mxu0 %v289
    %v428 = vpop.f32.mrb[0].mxu0
    %v429 = vadd.f32 %v246, %v428
    %v430 = vpop.f32.mrb[0].mxu0
    %431 = vmatprep.mubr.f32.mxu0 0.0
    %432 = vmatmul.mubr.f32.gmra.mrb[0].mxu0 %v292
    %v433 = vpop.f32.mrb[0].mxu0
    %v434 = vadd.f32 %v246, %v433
    %v435 = vpop.f32.mrb[0].mxu0
    %436 = vmatprep.mubr.f32.mxu0 0.0
    %437 = vmatmul.mubr.f32.gmra.mrb[0].mxu0 %v295
    %v438 = vpop.f32.mrb[0].mxu0
    %v439 = vadd.f32 %v246, %v438
    %v440 = vpop.f32.mrb[0].mxu0
    %441 = vdwg.mxu0
    %v442 = vmax.f32 %v364, 0.0
    %v443 = vmax.f32 %v369, 0.0
    %v444 = vmax.f32 %v374, 0.0
    %v445 = vmax.f32 %v379, 0.0
    %v446 = vmax.f32 %v384, 0.0
    %v447 = vmax.f32 %v389, 0.0
    %v448 = vmax.f32 %v394, 0.0
    %v449 = vmax.f32 %v399, 0.0
    %v450 = vmax.f32 %v404, 0.0
    %v451 = vmax.f32 %v409, 0.0
    %v452 = vmax.f32 %v414, 0.0
    %v453 = vmax.f32 %v419, 0.0
    %v454 = vmax.f32 %v424, 0.0
    %v455 = vmax.f32 %v429, 0.0
    %v456 = vmax.f32 %v434, 0.0
    %v457 = vmax.f32 %v439, 0.0
    %v458 = vld [vmem:[%s5] sm:$0xff]
    %v459 = vld [vmem:[%s5 + $0x8] sm:$0xff]
    %v460 = vld [vmem:[%s5 + $0x10] sm:$0xff]
    %v461 = vld [vmem:[%s5 + $0x18] sm:$0xff]
    %v462 = vld [vmem:[%s6] sm:$0x1]
    %v464 = vlaneseq
    %v465 = vshrl.u32 %v464, 7
    %v466 = vsub.s32 0, %v465
    %v467 = vrot.slane %v462, %v466
    %vm469 = vcmask 261120
    %v471 = vsel %vm469, %v442, 0
    %v474 = vsel %vm469, %v443, 0
    %v477 = vsel %vm469, %v444, 0
    %v480 = vsel %vm469, %v445, 0
    %v483 = vsel %vm469, %v446, 0
    %v486 = vsel %vm469, %v447, 0
    %v489 = vsel %vm469, %v448, 0
    %v492 = vsel %vm469, %v449, 0
    %v495 = vsel %vm469, %v450, 0
    %v498 = vsel %vm469, %v451, 0
    %v501 = vsel %vm469, %v452, 0
    %v504 = vsel %vm469, %v453, 0
    %v507 = vsel %vm469, %v454, 0
    %v510 = vsel %vm469, %v455, 0
    %v513 = vsel %vm469, %v456, 0
    %v516 = vsel %vm469, %v457, 0
    %518 = vmatprep.subr.mxu0 0.0
    %519 = vmatpush1.msra.mxu0 %v458
    %520 = vmatprep.subr.mxu0 0.0
    %521 = vmatpush1.msra.mxu0 %v459
    %522 = vmatprep.subr.mxu0 0.0
    %523 = vmatpush1.msra.mxu0 %v460
    %524 = vmatprep.subr.mxu0 0.0
    %525 = vmatpush1.msra.mxu0 %v461
    %526 = vmatprep.subr.mxu0 0.0
    %527 = vmatpush1.msra.mxu0 0.0
    %528 = vmatprep.subr.mxu0 0.0
    %529 = vmatpush1.msra.mxu0 0.0
    %530 = vmatprep.subr.mxu0 0.0
    %531 = vmatpush1.msra.mxu0 0.0
    %532 = vmatprep.subr.mxu0 0.0
    %533 = vmatpush1.msra.mxu0 0.0
    %534 = vmatprep.subr.mxu0 0.0
    %535 = vmatpush1.msra.mxu0 0.0
    %536 = vmatprep.subr.mxu0 0.0
    %537 = vmatpush1.msra.mxu0 0.0
    %538 = vmatprep.subr.mxu0 0.0
    %539 = vmatpush1.msra.mxu0 0.0
    %540 = vmatprep.subr.mxu0 0.0
    %541 = vmatpush1.msra.mxu0 0.0
    %542 = vmatprep.subr.mxu0 0.0
    %543 = vmatpush1.msra.mxu0 0.0
    %544 = vmatprep.subr.mxu0 0.0
    %545 = vmatpush1.msra.mxu0 0.0
    %546 = vmatprep.subr.mxu0 0.0
    %547 = vmatpush1.msra.mxu0 0.0
    %548 = vmatprep.subr.mxu0 0.0
    %549 = vmatpush1.msra.mxu0 0.0
    %550 = vmatprep.subr.mxu0 0.0
    %551 = vmatpush1.msra.mxu0 0.0
    %552 = vmatprep.subr.mxu0 0.0
    %553 = vmatpush1.msra.mxu0 0.0
    %554 = vmatprep.subr.mxu0 0.0
    %555 = vmatpush1.msra.mxu0 0.0
    %556 = vmatprep.subr.mxu0 0.0
    %557 = vmatpush1.msra.mxu0 0.0
    %558 = vmatprep.subr.mxu0 0.0
    %559 = vmatpush1.msra.mxu0 0.0
    %560 = vmatprep.subr.mxu0 0.0
    %561 = vmatpush1.msra.mxu0 0.0
    %562 = vmatprep.subr.mxu0 0.0
    %563 = vmatpush1.msra.mxu0 0.0
    %564 = vmatprep.subr.mxu0 0.0
    %565 = vmatpush1.msra.mxu0 0.0
    %566 = vmatprep.subr.mxu0 0.0
    %567 = vmatpush1.msra.mxu0 0.0
    %568 = vmatprep.subr.mxu0 0.0
    %569 = vmatpush1.msra.mxu0 0.0
    %570 = vmatprep.subr.mxu0 0.0
    %571 = vmatpush1.msra.mxu0 0.0
    %572 = vmatprep.subr.mxu0 0.0
    %573 = vmatpush1.msra.mxu0 0.0
    %574 = vmatprep.subr.mxu0 0.0
    %575 = vmatpush1.msra.mxu0 0.0
    %576 = vmatprep.subr.mxu0 0.0
    %577 = vmatpush1.msra.mxu0 0.0
    %578 = vmatprep.subr.mxu0 0.0
    %579 = vmatpush1.msra.mxu0 0.0
    %580 = vmatprep.subr.mxu0 0.0
    %581 = vmatpush1.msra.mxu0 0.0
    %582 = vmatprep.mubr.f32.mxu0 0.0
    %583 = vmatmul.mubr.f32.gmra.mrb[0].mxu0 %v471
    %v584 = vpop.f32.mrb[0].mxu0
    %v585 = vadd.f32 %v467, %v584
    %v586 = vpop.f32.mrb[0].mxu0
    %587 = vmatprep.mubr.f32.mxu0 0.0
    %588 = vmatmul.mubr.f32.gmra.mrb[0].mxu0 %v474
    %v589 = vpop.f32.mrb[0].mxu0
    %v590 = vadd.f32 %v467, %v589
    %v591 = vpop.f32.mrb[0].mxu0
    %592 = vmatprep.mubr.f32.mxu0 0.0
    %593 = vmatmul.mubr.f32.gmra.mrb[0].mxu0 %v477
    %v594 = vpop.f32.mrb[0].mxu0
    %v595 = vadd.f32 %v467, %v594
    %v596 = vpop.f32.mrb[0].mxu0
    %597 = vmatprep.mubr.f32.mxu0 0.0
    %598 = vmatmul.mubr.f32.gmra.mrb[0].mxu0 %v480
    %v599 = vpop.f32.mrb[0].mxu0
    %v600 = vadd.f32 %v467, %v599
    %v601 = vpop.f32.mrb[0].mxu0
    %602 = vmatprep.mubr.f32.mxu0 0.0
    %603 = vmatmul.mubr.f32.gmra.mrb[0].mxu0 %v483
    %v604 = vpop.f32.mrb[0].mxu0
    %v605 = vadd.f32 %v467, %v604
    %v606 = vpop.f32.mrb[0].mxu0
    %607 = vmatprep.mubr.f32.mxu0 0.0
    %608 = vmatmul.mubr.f32.gmra.mrb[0].mxu0 %v486
    %v609 = vpop.f32.mrb[0].mxu0
    %v610 = vadd.f32 %v467, %v609
    %v611 = vpop.f32.mrb[0].mxu0
    %612 = vmatprep.mubr.f32.mxu0 0.0
    %613 = vmatmul.mubr.f32.gmra.mrb[0].mxu0 %v489
    %v614 = vpop.f32.mrb[0].mxu0
    %v615 = vadd.f32 %v467, %v614
    %v616 = vpop.f32.mrb[0].mxu0
    %617 = vmatprep.mubr.f32.mxu0 0.0
    %618 = vmatmul.mubr.f32.gmra.mrb[0].mxu0 %v492
    %v619 = vpop.f32.mrb[0].mxu0
    %v620 = vadd.f32 %v467, %v619
    %v621 = vpop.f32.mrb[0].mxu0
    %622 = vmatprep.mubr.f32.mxu0 0.0
    %623 = vmatmul.mubr.f32.gmra.mrb[0].mxu0 %v495
    %v624 = vpop.f32.mrb[0].mxu0
    %v625 = vadd.f32 %v467, %v624
    %v626 = vpop.f32.mrb[0].mxu0
    %627 = vmatprep.mubr.f32.mxu0 0.0
    %628 = vmatmul.mubr.f32.gmra.mrb[0].mxu0 %v498
    %v629 = vpop.f32.mrb[0].mxu0
    %v630 = vadd.f32 %v467, %v629
    %v631 = vpop.f32.mrb[0].mxu0
    %632 = vmatprep.mubr.f32.mxu0 0.0
    %633 = vmatmul.mubr.f32.gmra.mrb[0].mxu0 %v501
    %v634 = vpop.f32.mrb[0].mxu0
    %v635 = vadd.f32 %v467, %v634
    %v636 = vpop.f32.mrb[0].mxu0
    %637 = vmatprep.mubr.f32.mxu0 0.0
    %638 = vmatmul.mubr.f32.gmra.mrb[0].mxu0 %v504
    %v639 = vpop.f32.mrb[0].mxu0
    %v640 = vadd.f32 %v467, %v639
    %v641 = vpop.f32.mrb[0].mxu0
    %642 = vmatprep.mubr.f32.mxu0 0.0
    %643 = vmatmul.mubr.f32.gmra.mrb[0].mxu0 %v507
    %v644 = vpop.f32.mrb[0].mxu0
    %v645 = vadd.f32 %v467, %v644
    %v646 = vpop.f32.mrb[0].mxu0
    %647 = vmatprep.mubr.f32.mxu0 0.0
    %648 = vmatmul.mubr.f32.gmra.mrb[0].mxu0 %v510
    %v649 = vpop.f32.mrb[0].mxu0
    %v650 = vadd.f32 %v467, %v649
    %v651 = vpop.f32.mrb[0].mxu0
    %652 = vmatprep.mubr.f32.mxu0 0.0
    %653 = vmatmul.mubr.f32.gmra.mrb[0].mxu0 %v513
    %v654 = vpop.f32.mrb[0].mxu0
    %v655 = vadd.f32 %v467, %v654
    %v656 = vpop.f32.mrb[0].mxu0
    %657 = vmatprep.mubr.f32.mxu0 0.0
    %658 = vmatmul.mubr.f32.gmra.mrb[0].mxu0 %v516
    %v659 = vpop.f32.mrb[0].mxu0
    %v660 = vadd.f32 %v467, %v659
    %v661 = vpop.f32.mrb[0].mxu0
    %662 = vdwg.mxu0
    %v663 = vmax.f32 %v585, 0.0
    %v664 = vmax.f32 %v590, 0.0
    %v665 = vmax.f32 %v595, 0.0
    %v666 = vmax.f32 %v600, 0.0
    %v667 = vmax.f32 %v605, 0.0
    %v668 = vmax.f32 %v610, 0.0
    %v669 = vmax.f32 %v615, 0.0
    %v670 = vmax.f32 %v620, 0.0
    %v671 = vmax.f32 %v625, 0.0
    %v672 = vmax.f32 %v630, 0.0
    %v673 = vmax.f32 %v635, 0.0
    %v674 = vmax.f32 %v640, 0.0
    %v675 = vmax.f32 %v645, 0.0
    %v676 = vmax.f32 %v650, 0.0
    %v677 = vmax.f32 %v655, 0.0
    %v678 = vmax.f32 %v660, 0.0
    %v679 = vld [vmem:[%s7] sm:$0xff]
    %v680 = vld [vmem:[%s7 + $0x8] sm:$0xff]
    %v681 = vld [vmem:[%s7 + $0x10] sm:$0xff]
    %v682 = vld [vmem:[%s7 + $0x18] sm:$0xff]
    %v683 = vld [vmem:[%s7 + $0x20] sm:$0xff]
    %v684 = vld [vmem:[%s7 + $0x28] sm:$0xff]
    %v685 = vld [vmem:[%s7 + $0x30] sm:$0xff]
    %v686 = vld [vmem:[%s7 + $0x38] sm:$0xff]
    %v687 = vld [vmem:[%s8] sm:$0x1]
    %v689 = vlaneseq
    %v690 = vshrl.u32 %v689, 7
    %v691 = vsub.s32 0, %v690
    %v692 = vrot.slane %v687, %v691
    %v695 = vsel %vm248, %v663, 0
    %v698 = vsel %vm248, %v664, 0
    %v701 = vsel %vm248, %v665, 0
    %v704 = vsel %vm248, %v666, 0
    %v707 = vsel %vm248, %v667, 0
    %v710 = vsel %vm248, %v668, 0
    %v713 = vsel %vm248, %v669, 0
    %v716 = vsel %vm248, %v670, 0
    %v719 = vsel %vm248, %v671, 0
    %v722 = vsel %vm248, %v672, 0
    %v725 = vsel %vm248, %v673, 0
    %v728 = vsel %vm248, %v674, 0
    %v731 = vsel %vm248, %v675, 0
    %v734 = vsel %vm248, %v676, 0
    %v737 = vsel %vm248, %v677, 0
    %v740 = vsel %vm248, %v678, 0
    %742 = vmatprep.subr.mxu0 0.0
    %743 = vmatpush1.msra.mxu0 %v679
    %744 = vmatprep.subr.mxu0 0.0
    %745 = vmatpush1.msra.mxu0 %v680
    %746 = vmatprep.subr.mxu0 0.0
    %747 = vmatpush1.msra.mxu0 %v681
    %748 = vmatprep.subr.mxu0 0.0
    %749 = vmatpush1.msra.mxu0 %v682
    %750 = vmatprep.subr.mxu0 0.0
    %751 = vmatpush1.msra.mxu0 %v683
    %752 = vmatprep.subr.mxu0 0.0
    %753 = vmatpush1.msra.mxu0 %v684
    %754 = vmatprep.subr.mxu0 0.0
    %755 = vmatpush1.msra.mxu0 %v685
    %756 = vmatprep.subr.mxu0 0.0
    %757 = vmatpush1.msra.mxu0 %v686
    %758 = vmatprep.subr.mxu0 0.0
    %759 = vmatpush1.msra.mxu0 0.0
    %760 = vmatprep.subr.mxu0 0.0
    %761 = vmatpush1.msra.mxu0 0.0
    %762 = vmatprep.subr.mxu0 0.0
    %763 = vmatpush1.msra.mxu0 0.0
    %764 = vmatprep.subr.mxu0 0.0
    %765 = vmatpush1.msra.mxu0 0.0
    %766 = vmatprep.subr.mxu0 0.0
    %767 = vmatpush1.msra.mxu0 0.0
    %768 = vmatprep.subr.mxu0 0.0
    %769 = vmatpush1.msra.mxu0 0.0
    %770 = vmatprep.subr.mxu0 0.0
    %771 = vmatpush1.msra.mxu0 0.0
    %772 = vmatprep.subr.mxu0 0.0
    %773 = vmatpush1.msra.mxu0 0.0
    %774 = vmatprep.subr.mxu0 0.0
    %775 = vmatpush1.msra.mxu0 0.0
    %776 = vmatprep.subr.mxu0 0.0
    %777 = vmatpush1.msra.mxu0 0.0
    %778 = vmatprep.subr.mxu0 0.0
    %779 = vmatpush1.msra.mxu0 0.0
    %780 = vmatprep.subr.mxu0 0.0
    %781 = vmatpush1.msra.mxu0 0.0
    %782 = vmatprep.subr.mxu0 0.0
    %783 = vmatpush1.msra.mxu0 0.0
    %784 = vmatprep.subr.mxu0 0.0
    %785 = vmatpush1.msra.mxu0 0.0
    %786 = vmatprep.subr.mxu0 0.0
    %787 = vmatpush1.msra.mxu0 0.0
    %788 = vmatprep.subr.mxu0 0.0
    %789 = vmatpush1.msra.mxu0 0.0
    %790 = vmatprep.subr.mxu0 0.0
    %791 = vmatpush1.msra.mxu0 0.0
    %792 = vmatprep.subr.mxu0 0.0
    %793 = vmatpush1.msra.mxu0 0.0
    %794 = vmatprep.subr.mxu0 0.0
    %795 = vmatpush1.msra.mxu0 0.0
    %796 = vmatprep.subr.mxu0 0.0
    %797 = vmatpush1.msra.mxu0 0.0
    %798 = vmatprep.subr.mxu0 0.0
    %799 = vmatpush1.msra.mxu0 0.0
    %800 = vmatprep.subr.mxu0 0.0
    %801 = vmatpush1.msra.mxu0 0.0
    %802 = vmatprep.subr.mxu0 0.0
    %803 = vmatpush1.msra.mxu0 0.0
    %804 = vmatprep.subr.mxu0 0.0
    %805 = vmatpush1.msra.mxu0 0.0
    %806 = vmatprep.mubr.f32.mxu0 0.0
    %807 = vmatmul.mubr.f32.gmra.mrb[0].mxu0 %v695
    %v808 = vpop.f32.mrb[0].mxu0
    %v809 = vadd.f32 %v692, %v808
    %v810 = vpop.f32.mrb[0].mxu0
    %811 = vmatprep.mubr.f32.mxu0 0.0
    %812 = vmatmul.mubr.f32.gmra.mrb[0].mxu0 %v698
    %v813 = vpop.f32.mrb[0].mxu0
    %v814 = vadd.f32 %v692, %v813
    %v815 = vpop.f32.mrb[0].mxu0
    %816 = vmatprep.mubr.f32.mxu0 0.0
    %817 = vmatmul.mubr.f32.gmra.mrb[0].mxu0 %v701
    %v818 = vpop.f32.mrb[0].mxu0
    %v819 = vadd.f32 %v692, %v818
    %v820 = vpop.f32.mrb[0].mxu0
    %821 = vmatprep.mubr.f32.mxu0 0.0
    %822 = vmatmul.mubr.f32.gmra.mrb[0].mxu0 %v704
    %v823 = vpop.f32.mrb[0].mxu0
    %v824 = vadd.f32 %v692, %v823
    %v825 = vpop.f32.mrb[0].mxu0
    %826 = vmatprep.mubr.f32.mxu0 0.0
    %827 = vmatmul.mubr.f32.gmra.mrb[0].mxu0 %v707
    %v828 = vpop.f32.mrb[0].mxu0
    %v829 = vadd.f32 %v692, %v828
    %v830 = vpop.f32.mrb[0].mxu0
    %831 = vmatprep.mubr.f32.mxu0 0.0
    %832 = vmatmul.mubr.f32.gmra.mrb[0].mxu0 %v710
    %v833 = vpop.f32.mrb[0].mxu0
    %v834 = vadd.f32 %v692, %v833
    %v835 = vpop.f32.mrb[0].mxu0
    %836 = vmatprep.mubr.f32.mxu0 0.0
    %837 = vmatmul.mubr.f32.gmra.mrb[0].mxu0 %v713
    %v838 = vpop.f32.mrb[0].mxu0
    %v839 = vadd.f32 %v692, %v838
    %v840 = vpop.f32.mrb[0].mxu0
    %841 = vmatprep.mubr.f32.mxu0 0.0
    %842 = vmatmul.mubr.f32.gmra.mrb[0].mxu0 %v716
    %v843 = vpop.f32.mrb[0].mxu0
    %v844 = vadd.f32 %v692, %v843
    %v845 = vpop.f32.mrb[0].mxu0
    %846 = vmatprep.mubr.f32.mxu0 0.0
    %847 = vmatmul.mubr.f32.gmra.mrb[0].mxu0 %v719
    %v848 = vpop.f32.mrb[0].mxu0
    %v849 = vadd.f32 %v692, %v848
    %v850 = vpop.f32.mrb[0].mxu0
    %851 = vmatprep.mubr.f32.mxu0 0.0
    %852 = vmatmul.mubr.f32.gmra.mrb[0].mxu0 %v722
    %v853 = vpop.f32.mrb[0].mxu0
    %v854 = vadd.f32 %v692, %v853
    %v855 = vpop.f32.mrb[0].mxu0
    %856 = vmatprep.mubr.f32.mxu0 0.0
    %857 = vmatmul.mubr.f32.gmra.mrb[0].mxu0 %v725
    %v858 = vpop.f32.mrb[0].mxu0
    %v859 = vadd.f32 %v692, %v858
    %v860 = vpop.f32.mrb[0].mxu0
    %861 = vmatprep.mubr.f32.mxu0 0.0
    %862 = vmatmul.mubr.f32.gmra.mrb[0].mxu0 %v728
    %v863 = vpop.f32.mrb[0].mxu0
    %v864 = vadd.f32 %v692, %v863
    %v865 = vpop.f32.mrb[0].mxu0
    %866 = vmatprep.mubr.f32.mxu0 0.0
    %867 = vmatmul.mubr.f32.gmra.mrb[0].mxu0 %v731
    %v868 = vpop.f32.mrb[0].mxu0
    %v869 = vadd.f32 %v692, %v868
    %v870 = vpop.f32.mrb[0].mxu0
    %871 = vmatprep.mubr.f32.mxu0 0.0
    %872 = vmatmul.mubr.f32.gmra.mrb[0].mxu0 %v734
    %v873 = vpop.f32.mrb[0].mxu0
    %v874 = vadd.f32 %v692, %v873
    %v875 = vpop.f32.mrb[0].mxu0
    %876 = vmatprep.mubr.f32.mxu0 0.0
    %877 = vmatmul.mubr.f32.gmra.mrb[0].mxu0 %v737
    %v878 = vpop.f32.mrb[0].mxu0
    %v879 = vadd.f32 %v692, %v878
    %v880 = vpop.f32.mrb[0].mxu0
    %881 = vmatprep.mubr.f32.mxu0 0.0
    %882 = vmatmul.mubr.f32.gmra.mrb[0].mxu0 %v740
    %v883 = vpop.f32.mrb[0].mxu0
    %v884 = vadd.f32 %v692, %v883
    %v885 = vpop.f32.mrb[0].mxu0
    %886 = vdwg.mxu0
    %v887 = vxor.u32 %v809, 2147483648
    %v888 = vxor.u32 %v814, 2147483648
    %v889 = vxor.u32 %v819, 2147483648
    %v890 = vxor.u32 %v824, 2147483648
    %v891 = vxor.u32 %v829, 2147483648
    %v892 = vxor.u32 %v834, 2147483648
    %v893 = vxor.u32 %v839, 2147483648
    %v894 = vxor.u32 %v844, 2147483648
    %v895 = vxor.u32 %v849, 2147483648
    %v896 = vxor.u32 %v854, 2147483648
    %v897 = vxor.u32 %v859, 2147483648
    %v898 = vxor.u32 %v864, 2147483648
    %v899 = vxor.u32 %v869, 2147483648
    %v900 = vxor.u32 %v874, 2147483648
    %v901 = vxor.u32 %v879, 2147483648
    %v902 = vxor.u32 %v884, 2147483648
    %v903 = vmul.f32 %v887, 1.442695
    %v904 = vpow.pop %v903
    %v905 = vmul.f32 %v888, 1.442695
    %v906 = vpow.pop %v905
    %v907 = vmul.f32 %v889, 1.442695
    %v908 = vpow.pop %v907
    %v909 = vmul.f32 %v890, 1.442695
    %v910 = vpow.pop %v909
    %v911 = vmul.f32 %v891, 1.442695
    %v912 = vpow.pop %v911
    %v913 = vmul.f32 %v892, 1.442695
    %v914 = vpow.pop %v913
    %v915 = vmul.f32 %v893, 1.442695
    %v916 = vpow.pop %v915
    %v917 = vmul.f32 %v894, 1.442695
    %v918 = vpow.pop %v917
    %v919 = vmul.f32 %v895, 1.442695
    %v920 = vpow.pop %v919
    %v921 = vmul.f32 %v896, 1.442695
    %v922 = vpow.pop %v921
    %v923 = vmul.f32 %v897, 1.442695
    %v924 = vpow.pop %v923
    %v925 = vmul.f32 %v898, 1.442695
    %v926 = vpow.pop %v925
    %v927 = vmul.f32 %v899, 1.442695
    %v928 = vpow.pop %v927
    %v929 = vmul.f32 %v900, 1.442695
    %v930 = vpow.pop %v929
    %v931 = vmul.f32 %v901, 1.442695
    %v932 = vpow.pop %v931
    %v933 = vmul.f32 %v902, 1.442695
    %v934 = vpow.pop %v933
    %v935 = vadd.f32 %v904, 1.0
    %v936 = vadd.f32 %v906, 1.0
    %v937 = vadd.f32 %v908, 1.0
    %v938 = vadd.f32 %v910, 1.0
    %v939 = vadd.f32 %v912, 1.0
    %v940 = vadd.f32 %v914, 1.0
    %v941 = vadd.f32 %v916, 1.0
    %v942 = vadd.f32 %v918, 1.0
    %v943 = vadd.f32 %v920, 1.0
    %v944 = vadd.f32 %v922, 1.0
    %v945 = vadd.f32 %v924, 1.0
    %v946 = vadd.f32 %v926, 1.0
    %v947 = vadd.f32 %v928, 1.0
    %v948 = vadd.f32 %v930, 1.0
    %v949 = vadd.f32 %v932, 1.0
    %v950 = vadd.f32 %v934, 1.0
    %v951 = vrcp.pop %v935
    %v952 = vmul.f32 1.0, %v951
    %v953 = vrcp.pop %v936
    %v954 = vmul.f32 1.0, %v953
    %v955 = vrcp.pop %v937
    %v956 = vmul.f32 1.0, %v955
    %v957 = vrcp.pop %v938
    %v958 = vmul.f32 1.0, %v957
    %v959 = vrcp.pop %v939
    %v960 = vmul.f32 1.0, %v959
    %v961 = vrcp.pop %v940
    %v962 = vmul.f32 1.0, %v961
    %v963 = vrcp.pop %v941
    %v964 = vmul.f32 1.0, %v963
    %v965 = vrcp.pop %v942
    %v966 = vmul.f32 1.0, %v965
    %v967 = vrcp.pop %v943
    %v968 = vmul.f32 1.0, %v967
    %v969 = vrcp.pop %v944
    %v970 = vmul.f32 1.0, %v969
    %v971 = vrcp.pop %v945
    %v972 = vmul.f32 1.0, %v971
    %v973 = vrcp.pop %v946
    %v974 = vmul.f32 1.0, %v973
    %v975 = vrcp.pop %v947
    %v976 = vmul.f32 1.0, %v975
    %v977 = vrcp.pop %v948
    %v978 = vmul.f32 1.0, %v977
    %v979 = vrcp.pop %v949
    %v980 = vmul.f32 1.0, %v979
    %v981 = vrcp.pop %v950
    %v982 = vmul.f32 1.0, %v981
    %983 = vst [vmem:[#allocation2] sm:$0xff] %v952
    %984 = vst [vmem:[#allocation2 + $0x8] sm:$0xff] %v954
    %985 = vst [vmem:[#allocation2 + $0x10] sm:$0xff] %v956
    %986 = vst [vmem:[#allocation2 + $0x18] sm:$0xff] %v958
    %987 = vst [vmem:[#allocation2 + $0x20] sm:$0xff] %v960
    %988 = vst [vmem:[#allocation2 + $0x28] sm:$0xff] %v962
    %989 = vst [vmem:[#allocation2 + $0x30] sm:$0xff] %v964
    %990 = vst [vmem:[#allocation2 + $0x38] sm:$0xff] %v966
    %991 = vst [vmem:[#allocation2 + $0x40] sm:$0xff] %v968
    %992 = vst [vmem:[#allocation2 + $0x48] sm:$0xff] %v970
    %993 = vst [vmem:[#allocation2 + $0x50] sm:$0xff] %v972
    %994 = vst [vmem:[#allocation2 + $0x58] sm:$0xff] %v974
    %995 = vst [vmem:[#allocation2 + $0x60] sm:$0xff] %v976
    %996 = vst [vmem:[#allocation2 + $0x68] sm:$0xff] %v978
    %997 = vst [vmem:[#allocation2 + $0x70] sm:$0xff] %v980
    %998 = vst [vmem:[#allocation2 + $0x78] sm:$0xff] %v982
    // Predicated region
    $region38: #{tpu_custom_call.1} parent=1 // pred_check
      _
    $region39: #{tpu_custom_call.1} parent=1 // pred_check_branch
      %1000 = sbr.rel (0) target = $region41
    $region40: #{tpu_custom_call.1} parent=1 // pred_region
      %s1002 = ssub.s32 2048, 2048
      %1003 = vsyncadd [#allocation3], %s1002
      %s1004 = sshll.u32 [#allocation2], 4
      %s1005 = int_to_ptr.vmem [resolvable:$true] %s1004
      %1010 = dma.vmem_to_hbm [thread:$0]  %s1005, 2048, %s9, [#allocation3], 128, 128, 8
    $region41: #{tpu_custom_call.1} parent=1 // pred_fallthru
      _
    // Predicated region
    $region42: #{tpu_custom_call.1} parent=1 // pred_check
      _
    $region43: #{tpu_custom_call.1} parent=1 // pred_check_branch
      %1012 = sbr.rel (0) target = $region45
    $region44: #{tpu_custom_call.1} parent=1 // pred_region
      %1013 = dma.done [#allocation3], 2048
    $region45: #{tpu_custom_call.1} parent=1 // pred_fallthru
      _
    %1014 = vsyncpa [#allocation3], 1

</llo_original>
